<compile_context>
chip_gen: v6e
topology: v6e:2x2x1
jax: 0.10.0
libtpu: 0.0.40
codegen_flags: <defaults>
</compile_context>

<pallas_src>
import functools

import jax
import jax.numpy as jnp
from jax.experimental import pallas as pl
from jax.experimental.pallas import tpu as pltpu


def _iwfl_partial_kernel(x_ref, t_ref, sum_t_ref, sum_l_ref, sum_lt_ref, *,
                         gamma, nc, n_total, chunks_per_split, needs_col_mask):
    """One grid step = (TB samples) x (one N-chunk).

    x_ref/t_ref:  (TB, NC) VMEM tiles of probabilities / binary targets.
    sum_*_ref:    (TB, 1) outputs, resident (accumulated) across the chunk axis.
    """
    j = pl.program_id(2)

    @pl.when(j == 0)
    def _():
        sum_t_ref[...] = jnp.zeros_like(sum_t_ref)
        sum_l_ref[...] = jnp.zeros_like(sum_l_ref)
        sum_lt_ref[...] = jnp.zeros_like(sum_lt_ref)

    x = x_ref[...].astype(jnp.float32)          # (TB, NC)
    t_raw = t_ref[...]
    is_fg = t_raw != 0                          # binary mask
    t = t_raw.astype(jnp.float32)

    # Single-log BCE (exact for binary targets): p_true = prob of true class.
    # PyTorch's binary_cross_entropy clamps log at -100.
    p_true = jnp.where(is_fg, x, 1.0 - x)
    bce = -jnp.maximum(jnp.log(p_true), -100.0)
    pt = 1.0 - p_true
    l = bce * (pt ** gamma)                     # integer gamma -> integer_pow (VPU)

    if needs_col_mask:
        # Zero contributions from out-of-range columns (partial trailing chunk
        # and/or the duplicated clamped chunk of the odd split).  Static flag,
        # so the common aligned case pays nothing.
        p = pl.program_id(1)
        chunk = p * chunks_per_split + j                      # logical chunk index
        col = chunk * nc + jax.lax.broadcasted_iota(jnp.int32, x.shape, 1)
        valid = col < n_total
        t = jnp.where(valid, t, 0.0)
        l = jnp.where(valid, l, 0.0)

    sum_t_ref[...] += jnp.sum(t, axis=1, keepdims=True)
    sum_l_ref[...] += jnp.sum(l, axis=1, keepdims=True)
    sum_lt_ref[...] += jnp.sum(l * t, axis=1, keepdims=True)


def inverse_weighting_focal_loss(inputs, targets, gamma=2, correction=1,
                                 *, max_chunk_lanes=64 * 1024):
    """inputs/targets: NCHW (any shape with leading batch dim). Returns scalar mean loss."""
    # Keep gamma on the integer fast path when possible (avoids exp/log on EUP).
    if float(gamma) == int(gamma):
        gamma = int(gamma)

    B = inputs.shape[0]
    N = 1
    for d in inputs.shape[1:]:
        N *= d

    # Flatten; keep native dtypes (cast happens inside the kernel, no extra HBM pass).
    x2 = inputs.reshape(B, N)
    t2 = targets.reshape(B, N)

    LANE = 128
    max_chunk_lanes = max(LANE, (max_chunk_lanes // LANE) * LANE)

    # --- column chunking ---
    if N <= max_chunk_lanes:
        nc = N                      # single exact chunk (block dim == full array dim)
    else:
        nc = max_chunk_lanes        # multiple of 128; trailing chunk may be partial
    grid_j_total = pl.cdiv(N, nc)

    # --- row blocking: up to 8 samples per block ---
    tb = B if B <= 8 else 8
    grid_i = pl.cdiv(B, tb)

    # --- split the chunk axis into 2 parallel groups (megacore on v7x) ---
    P = 2 if grid_j_total >= 2 else 1
    jh = pl.cdiv(grid_j_total, P)   # chunks handled per split group

    # Mask needed if the trailing chunk is partial, or the odd split duplicates
    # (and therefore must zero) the last chunk in group p=1.
    needs_col_mask = (N % nc != 0) or (P * jh != grid_j_total)

    kernel = functools.partial(
        _iwfl_partial_kernel, gamma=gamma, nc=nc, n_total=N,
        chunks_per_split=jh, needs_col_mask=needs_col_mask)

    def in_map(i, p, j):
        # Clamp so the duplicated chunk of an odd split stays in range; its
        # contribution is zeroed in-kernel by the column mask.
        return (i, jnp.minimum(p * jh + j, grid_j_total - 1))

    out_spec = pl.BlockSpec((None, tb, 1), lambda i, p, j: (p, i, 0))
    out_sd = jax.ShapeDtypeStruct((P, B, 1), jnp.float32)

    part_t, part_l, part_lt = pl.pallas_call(
        kernel,
        out_shape=(out_sd, out_sd, out_sd),
        grid_spec=pltpu.PrefetchScalarGridSpec(
            num_scalar_prefetch=0,
            grid=(grid_i, P, jh),
            in_specs=[
                pl.BlockSpec((tb, nc), in_map),
                pl.BlockSpec((tb, nc), in_map),
            ],
            out_specs=(out_spec, out_spec, out_spec),
        ),
        compiler_params=pltpu.CompilerParams(
            # row blocks & split groups independent -> parallel (megacore on v7x);
            # chunk axis accumulates into resident outputs -> arbitrary (last).
            dimension_semantics=("parallel", "parallel", "arbitrary"),
        ),
    )(x2, t2)

    # ---- tiny per-sample epilogue (inverse weighting + mean) on (B,) vectors ----
    t_sum = jnp.sum(part_t, axis=(0, 2))     # sum over split groups -> (B,)
    sum_l = jnp.sum(part_l, axis=(0, 2))     # sum over row of bce * pt**gamma
    sum_lt = jnp.sum(part_lt, axis=(0, 2))   # foreground part: bce * pt**gamma * t

    num_element = jnp.float32(N + correction)
    num_nodule = t_sum + jnp.float32(correction)
    bw0 = num_element / 2.0 / (num_element - num_nodule)
    fw0 = num_element / 2.0 / num_nodule
    denom = bw0 + fw0
    has_fg = t_sum > 0.0
    bw = jnp.where(has_fg, bw0 / denom, jnp.float32(1.0))
    fw = jnp.where(has_fg, fw0 / denom, jnp.float32(1.0))

    sum_lb = sum_l - sum_lt    # background part
    per_row = fw * sum_lt + bw * sum_lb
    return jnp.sum(per_row) / jnp.float32(B * N)


def _reference(inputs, targets, gamma=2, correction=1):
    """Pure-JAX reference mirroring the PyTorch forward."""
    B = inputs.shape[0]
    x = inputs.reshape(B, -1).astype(jnp.float32)
    t = targets.reshape(B, -1).astype(jnp.float32)
    N = x.shape[1]
    t_sum = jnp.sum(t, axis=1)
    num_element = jnp.float32(N + correction)
    num_nodule = t_sum + correction
    bw0 = num_element / 2.0 / (num_element - num_nodule)
    fw0 = num_element / 2.0 / num_nodule
    s = bw0 + fw0
    has_fg = t_sum > 0
    bw = jnp.where(has_fg, bw0 / s, 1.0)[:, None]
    fw = jnp.where(has_fg, fw0 / s, 1.0)[:, None]
    focal_weight = fw * t + bw * (1.0 - t)
    pt = (1.0 - x) * t + x * (1.0 - t)
    bce = -(t * jnp.maximum(jnp.log(x), -100.0)
            + (1.0 - t) * jnp.maximum(jnp.log(1.0 - x), -100.0))
    return jnp.mean(bce * focal_weight * pt ** gamma)


if __name__ == "__main__":
    key = jax.random.PRNGKey(0)
    k1, k2, k3, k4, k5, k6 = jax.random.split(key, 6)

    # Case 1: nominal small NCHW shape (single exact chunk, full row block).
    B, C, H, W = 2, 4, 16, 16
    inputs = jax.nn.sigmoid(jax.random.normal(k1, (B, C, H, W), dtype=jnp.float32))
    targets = (jax.random.uniform(k2, (B, C, H, W)) < 0.3).astype(jnp.float32)
    targets = targets.at[1].set(0.0)  # exercise the "no foreground" branch

    loss = inverse_weighting_focal_loss(inputs, targets, gamma=2, correction=1)
    loss = jax.block_until_ready(loss)
    ref = _reference(inputs, targets, gamma=2, correction=1)
    assert jnp.allclose(loss, ref, rtol=1e-5, atol=1e-6), (loss, ref)

    # Case 2: partial row block (B=10, tb=8), partial trailing column chunk
    # (N=255, chunk=128) and 2-way split of the chunk axis — no padding copies.
    B2, C2, H2, W2 = 10, 1, 15, 17
    inputs2 = jax.nn.sigmoid(jax.random.normal(k3, (B2, C2, H2, W2), dtype=jnp.float32))
    targets2 = (jax.random.uniform(k4, (B2, C2, H2, W2)) < 0.2).astype(jnp.float32)
    targets2 = targets2.at[0].set(0.0)

    loss2 = inverse_weighting_focal_loss(inputs2, targets2, gamma=2, correction=1,
                                         max_chunk_lanes=128)
    loss2 = jax.block_until_ready(loss2)
    ref2 = _reference(inputs2, targets2, gamma=2, correction=1)
    assert jnp.allclose(loss2, ref2, rtol=1e-5, atol=1e-6), (loss2, ref2)

    # Case 3: odd number of chunks (N=384, chunk=128 -> 3 chunks) exercises the
    # clamped/duplicated chunk of the 2-way split (masked to zero in-kernel).
    B3, C3, H3, W3 = 3, 2, 12, 16
    inputs3 = jax.nn.sigmoid(jax.random.normal(k5, (B3, C3, H3, W3), dtype=jnp.float32))
    targets3 = (jax.random.uniform(k6, (B3, C3, H3, W3)) < 0.25).astype(jnp.float32)

    loss3 = inverse_weighting_focal_loss(inputs3, targets3, gamma=2, correction=1,
                                         max_chunk_lanes=128)
    loss3 = jax.block_until_ready(loss3)
    ref3 = _reference(inputs3, targets3, gamma=2, correction=1)
    assert jnp.allclose(loss3, ref3, rtol=1e-5, atol=1e-6), (loss3, ref3)

    print("KERNEL_OK")
</pallas_src>

<mosaic_0001>
module attributes {stable_mosaic.version = 11 : i64} {
  func.func @_iwfl_partial_kernel(%arg0: i32, %arg1: i32, %arg2: i32, %arg3: memref<2x1024xf32, #tpu.memory_space<vmem>>, %arg4: memref<2x1024xf32, #tpu.memory_space<vmem>>, %arg5: memref<1x2x1xf32, #tpu.memory_space<vmem>>, %arg6: memref<1x2x1xf32, #tpu.memory_space<vmem>>, %arg7: memref<1x2x1xf32, #tpu.memory_space<vmem>>) attributes {dimension_semantics = [#tpu.dimension_semantics<parallel>, #tpu.dimension_semantics<parallel>, #tpu.dimension_semantics<arbitrary>], iteration_bounds = array<i64: 1, 1, 1>, scalar_prefetch = 0 : i64, scratch_operands = 0 : i64, tpu.core_type = #tpu.core_type<tc>, window_params = [{transform_indices = @transform_0, window_bounds = array<i64: 2, 1024>}, {transform_indices = @transform_1, window_bounds = array<i64: 2, 1024>}, {transform_indices = @transform_2, window_bounds = array<i64: 1, 2, 1>}, {transform_indices = @transform_3, window_bounds = array<i64: 1, 2, 1>}, {transform_indices = @transform_4, window_bounds = array<i64: 1, 2, 1>}]} {
    %c0_i32 = arith.constant 0 : i32
    %0 = arith.cmpi eq, %arg2, %c0_i32 : i32
    %1 = arith.extui %0 : i1 to i32
    %c0_i32_0 = arith.constant 0 : i32
    %2 = arith.cmpi ne, %1, %c0_i32_0 : i32
    scf.if %2 {
      %cst_29 = arith.constant 0.000000e+00 : f32
      %44 = vector.broadcast %cst_29 : f32 to vector<2x1xf32>
      %c0_30 = arith.constant 0 : index
      %c0_31 = arith.constant 0 : index
      %c0_32 = arith.constant 0 : index
      %45 = vector.load %arg5[%c0_30, %c0_31, %c0_32] : memref<1x2x1xf32, #tpu.memory_space<vmem>>, vector<1x2x1xf32>
      %46 = vector.shape_cast %45 : vector<1x2x1xf32> to vector<2x1xf32>
      %47 = vector.shape_cast %44 : vector<2x1xf32> to vector<1x2x1xf32>
      tpu.vector_store %arg5[%c0_30, %c0_31, %c0_32], %47 {strides = array<i32>} : memref<1x2x1xf32, #tpu.memory_space<vmem>>, vector<1x2x1xf32>,
      %cst_33 = arith.constant 0.000000e+00 : f32
      %48 = vector.broadcast %cst_33 : f32 to vector<2x1xf32>
      %c0_34 = arith.constant 0 : index
      %c0_35 = arith.constant 0 : index
      %c0_36 = arith.constant 0 : index
      %49 = vector.load %arg6[%c0_34, %c0_35, %c0_36] : memref<1x2x1xf32, #tpu.memory_space<vmem>>, vector<1x2x1xf32>
      %50 = vector.shape_cast %49 : vector<1x2x1xf32> to vector<2x1xf32>
      %51 = vector.shape_cast %48 : vector<2x1xf32> to vector<1x2x1xf32>
      tpu.vector_store %arg6[%c0_34, %c0_35, %c0_36], %51 {strides = array<i32>} : memref<1x2x1xf32, #tpu.memory_space<vmem>>, vector<1x2x1xf32>,
      %cst_37 = arith.constant 0.000000e+00 : f32
      %52 = vector.broadcast %cst_37 : f32 to vector<2x1xf32>
      %c0_38 = arith.constant 0 : index
      %c0_39 = arith.constant 0 : index
      %c0_40 = arith.constant 0 : index
      %53 = vector.load %arg7[%c0_38, %c0_39, %c0_40] : memref<1x2x1xf32, #tpu.memory_space<vmem>>, vector<1x2x1xf32>
      %54 = vector.shape_cast %53 : vector<1x2x1xf32> to vector<2x1xf32>
      %55 = vector.shape_cast %52 : vector<2x1xf32> to vector<1x2x1xf32>
      tpu.vector_store %arg7[%c0_38, %c0_39, %c0_40], %55 {strides = array<i32>} : memref<1x2x1xf32, #tpu.memory_space<vmem>>, vector<1x2x1xf32>,
    } else {
    }
    %c0 = arith.constant 0 : index
    %c0_1 = arith.constant 0 : index
    %3 = vector.load %arg3[%c0, %c0_1] : memref<2x1024xf32, #tpu.memory_space<vmem>>, vector<2x1024xf32>
    %c0_2 = arith.constant 0 : index
    %c0_3 = arith.constant 0 : index
    %4 = vector.load %arg4[%c0_2, %c0_3] : memref<2x1024xf32, #tpu.memory_space<vmem>>, vector<2x1024xf32>
    %cst = arith.constant 0.000000e+00 : f32
    %5 = vector.broadcast %cst : f32 to vector<2x1024xf32>
    %6 = arith.cmpf one, %4, %5 : vector<2x1024xf32>
    %cst_4 = arith.constant 1.000000e+00 : f32
    %7 = vector.broadcast %cst_4 : f32 to vector<2x1024xf32>
    %8 = arith.subf %7, %3 : vector<2x1024xf32>
    %9 = arith.select %6, %3, %8 : vector<2x1024xi1>, vector<2x1024xf32>
    %10 = math.log %9 : vector<2x1024xf32>
    %cst_5 = arith.constant -1.000000e+02 : f32
    %11 = vector.broadcast %cst_5 : f32 to vector<2x1024xf32>
    %12 = arith.maximumf %10, %11 : vector<2x1024xf32>
    %cst_6 = arith.constant 0.000000e+00 : f32
    %13 = vector.broadcast %cst_6 : f32 to vector<2x1024xf32>
    %14 = arith.subf %13, %12 : vector<2x1024xf32>
    %cst_7 = arith.constant 1.000000e+00 : f32
    %15 = vector.broadcast %cst_7 : f32 to vector<2x1024xf32>
    %16 = arith.subf %15, %9 : vector<2x1024xf32>
    %17 = arith.mulf %16, %16 : vector<2x1024xf32>
    %18 = arith.mulf %14, %17 : vector<2x1024xf32>
    %c0_8 = arith.constant 0 : index
    %c0_9 = arith.constant 0 : index
    %c0_10 = arith.constant 0 : index
    %19 = vector.load %arg5[%c0_8, %c0_9, %c0_10] : memref<1x2x1xf32, #tpu.memory_space<vmem>>, vector<1x2x1xf32>
    %20 = vector.shape_cast %19 : vector<1x2x1xf32> to vector<2x1xf32>
    %cst_11 = arith.constant dense<0.000000e+00> : vector<2xf32>
    %21 = vector.multi_reduction <add>, %4, %cst_11 [1] : vector<2x1024xf32> to vector<2xf32>
    %22 = vector.shape_cast %21 : vector<2xf32> to vector<2x1xf32>
    %23 = arith.addf %20, %22 : vector<2x1xf32>
    %c0_12 = arith.constant 0 : index
    %c0_13 = arith.constant 0 : index
    %c0_14 = arith.constant 0 : index
    %24 = vector.load %arg5[%c0_12, %c0_13, %c0_14] : memref<1x2x1xf32, #tpu.memory_space<vmem>>, vector<1x2x1xf32>
    %25 = vector.shape_cast %24 : vector<1x2x1xf32> to vector<2x1xf32>
    %26 = vector.shape_cast %23 : vector<2x1xf32> to vector<1x2x1xf32>
    tpu.vector_store %arg5[%c0_12, %c0_13, %c0_14], %26 {strides = array<i32>} : memref<1x2x1xf32, #tpu.memory_space<vmem>>, vector<1x2x1xf32>,
    %c0_15 = arith.constant 0 : index
    %c0_16 = arith.constant 0 : index
    %c0_17 = arith.constant 0 : index
    %27 = vector.load %arg6[%c0_15, %c0_16, %c0_17] : memref<1x2x1xf32, #tpu.memory_space<vmem>>, vector<1x2x1xf32>
    %28 = vector.shape_cast %27 : vector<1x2x1xf32> to vector<2x1xf32>
    %cst_18 = arith.constant dense<0.000000e+00> : vector<2xf32>
    %29 = vector.multi_reduction <add>, %18, %cst_18 [1] : vector<2x1024xf32> to vector<2xf32>
    %30 = vector.shape_cast %29 : vector<2xf32> to vector<2x1xf32>
    %31 = arith.addf %28, %30 : vector<2x1xf32>
    %c0_19 = arith.constant 0 : index
    %c0_20 = arith.constant 0 : index
    %c0_21 = arith.constant 0 : index
    %32 = vector.load %arg6[%c0_19, %c0_20, %c0_21] : memref<1x2x1xf32, #tpu.memory_space<vmem>>, vector<1x2x1xf32>
    %33 = vector.shape_cast %32 : vector<1x2x1xf32> to vector<2x1xf32>
    %34 = vector.shape_cast %31 : vector<2x1xf32> to vector<1x2x1xf32>
    tpu.vector_store %arg6[%c0_19, %c0_20, %c0_21], %34 {strides = array<i32>} : memref<1x2x1xf32, #tpu.memory_space<vmem>>, vector<1x2x1xf32>,
    %c0_22 = arith.constant 0 : index
    %c0_23 = arith.constant 0 : index
    %c0_24 = arith.constant 0 : index
    %35 = vector.load %arg7[%c0_22, %c0_23, %c0_24] : memref<1x2x1xf32, #tpu.memory_space<vmem>>, vector<1x2x1xf32>
    %36 = vector.shape_cast %35 : vector<1x2x1xf32> to vector<2x1xf32>
    %37 = arith.mulf %18, %4 : vector<2x1024xf32>
    %cst_25 = arith.constant dense<0.000000e+00> : vector<2xf32>
    %38 = vector.multi_reduction <add>, %37, %cst_25 [1] : vector<2x1024xf32> to vector<2xf32>
    %39 = vector.shape_cast %38 : vector<2xf32> to vector<2x1xf32>
    %40 = arith.addf %36, %39 : vector<2x1xf32>
    %c0_26 = arith.constant 0 : index
    %c0_27 = arith.constant 0 : index
    %c0_28 = arith.constant 0 : index
    %41 = vector.load %arg7[%c0_26, %c0_27, %c0_28] : memref<1x2x1xf32, #tpu.memory_space<vmem>>, vector<1x2x1xf32>
    %42 = vector.shape_cast %41 : vector<1x2x1xf32> to vector<2x1xf32>
    %43 = vector.shape_cast %40 : vector<2x1xf32> to vector<1x2x1xf32>
    tpu.vector_store %arg7[%c0_26, %c0_27, %c0_28], %43 {strides = array<i32>} : memref<1x2x1xf32, #tpu.memory_space<vmem>>, vector<1x2x1xf32>,
    return
  }
  func.func @transform_0(%arg0: i32, %arg1: i32, %arg2: i32) -> (i32, i32) {
    %c1_i32 = arith.constant 1 : i32
    %0 = arith.muli %arg1, %c1_i32 : i32
    %1 = arith.addi %0, %arg2 : i32
    %c0_i32 = arith.constant 0 : i32
    %2 = arith.minsi %1, %c0_i32 : i32
    %c0_i32_0 = arith.constant 0 : i32
    return %arg0, %2 : i32, i32
  }
  func.func @transform_1(%arg0: i32, %arg1: i32, %arg2: i32) -> (i32, i32) {
    %c1_i32 = arith.constant 1 : i32
    %0 = arith.muli %arg1, %c1_i32 : i32
    %1 = arith.addi %0, %arg2 : i32
    %c0_i32 = arith.constant 0 : i32
    %2 = arith.minsi %1, %c0_i32 : i32
    %c0_i32_0 = arith.constant 0 : i32
    return %arg0, %2 : i32, i32
  }
  func.func @transform_2(%arg0: i32, %arg1: i32, %arg2: i32) -> (i32, i32, i32) {
    %c0_i32 = arith.constant 0 : i32
    %c0_i32_0 = arith.constant 0 : i32
    return %arg1, %arg0, %c0_i32 : i32, i32, i32
  }
  func.func @transform_3(%arg0: i32, %arg1: i32, %arg2: i32) -> (i32, i32, i32) {
    %c0_i32 = arith.constant 0 : i32
    %c0_i32_0 = arith.constant 0 : i32
    return %arg1, %arg0, %c0_i32 : i32, i32, i32
  }
  func.func @transform_4(%arg0: i32, %arg1: i32, %arg2: i32) -> (i32, i32, i32) {
    %c0_i32 = arith.constant 0 : i32
    %c0_i32_0 = arith.constant 0 : i32
    return %arg1, %arg0, %c0_i32 : i32, i32, i32
  }
}

</mosaic_0001>

<llo_original>
// kernel: tpu_custom_call.1
$region0: #{tpu_custom_call.1}
  #allocation0 [shape = 'u32[]', space=smem, size = 0x4, offset = 0x4, fixed_abs, tag = 'smem constant byte address 0x4 - core index']
  #allocation1 [shape = 'u32[144,128]{1,0:T(1,128)}', space=vmem, size = 0x12000, scoped, tag = 'internal scratch']
  %s0 = inlined_call_operand.hbm [shape: f32[2,1024], index: 0, kind: input, shape index: {}]
  %s1 = inlined_call_operand.hbm [shape: f32[2,1024], index: 1, kind: input, shape index: {}]
  %s2 = inlined_call_operand.vmem [shape: f32[1,2,1], index: 2, kind: output, shape index: {0}]
  %s3 = inlined_call_operand.vmem [shape: f32[1,2,1], index: 3, kind: output, shape index: {1}]
  %s4 = inlined_call_operand.vmem [shape: f32[1,2,1], index: 4, kind: output, shape index: {2}]
  %5 = xla_tuple %s2, %s3, %s4
  %s6 = sld [smem:[#allocation0]]
  $region46: #{tpu_custom_call.1} parent=0
    _
  %s8 = ssub.s32 1, %s6
  %s9 = scalar_select 0, %s8, %s6
  $region1: #{tpu_custom_call.1} parent=0
    #allocation2 [shape = 'u8[8192]{0}', space=vmem, size = 0x2000, scoped, tag = 'input window, operand 0, single buffered']
    #allocation3 [shape = 's32[1]{0}', space=sflag, size = 0x4, scoped, tag = 'scoped memory for tpu_custom_call.1']
    #allocation4 [shape = 'u8[8192]{0}', space=vmem, size = 0x2000, scoped, tag = 'input window, operand 1, single buffered']
    #allocation5 [shape = 's32[1]{0}', space=sflag, size = 0x4, scoped, tag = 'scoped memory for tpu_custom_call.1']
    %10 = vsyncpa [#allocation3], 0
    %11 = vsyncpa [#allocation5], 0
    // Predicated region
    $region2: #{tpu_custom_call.1} parent=1 // pred_check
      _
    $region3: #{tpu_custom_call.1} parent=1 // pred_check_branch
      %13 = sbr.rel (0) target = $region5
    $region4: #{tpu_custom_call.1} parent=1 // pred_region
      %s14 = sadd.s32 0, 0
      %p15 = scmp.lt.s32.totalorder %s14, 0
      %s16 = scalar_select %p15, %s14, 0
      %s17 = smul.u32 8, %s16
      %s19 = ssub.s32 256, 256
      %20 = vsyncadd [#allocation3], %s19
      %s21 = smul.addr %s17, 32
      %s22 = scalar_lea.hbm %s0, %s21
      %s24 = sshll.u32 [#allocation2], 4
      %s25 = int_to_ptr.vmem [resolvable:$true] %s24
      %27 = dma.hbm_to_vmem [thread:$0]  %s22, 256, %s25, [#allocation3]
    $region5: #{tpu_custom_call.1} parent=1 // pred_fallthru
      _
    // Predicated region
    $region6: #{tpu_custom_call.1} parent=1 // pred_check
      _
    $region7: #{tpu_custom_call.1} parent=1 // pred_check_branch
      %29 = sbr.rel (0) target = $region9
    $region8: #{tpu_custom_call.1} parent=1 // pred_region
      %s30 = sadd.s32 0, 0
      %p31 = scmp.lt.s32.totalorder %s30, 0
      %s32 = scalar_select %p31, %s30, 0
      %s33 = smul.u32 8, %s32
      %s35 = ssub.s32 256, 256
      %36 = vsyncadd [#allocation5], %s35
      %s37 = smul.addr %s33, 32
      %s38 = scalar_lea.hbm %s1, %s37
      %s40 = sshll.u32 [#allocation4], 4
      %s41 = int_to_ptr.vmem [resolvable:$true] %s40
      %43 = dma.hbm_to_vmem [thread:$0]  %s38, 256, %s41, [#allocation5]
    $region9: #{tpu_custom_call.1} parent=1 // pred_fallthru
      _
    // Predicated region
    $region10: #{tpu_custom_call.1} parent=1 // pred_check
      _
    $region11: #{tpu_custom_call.1} parent=1 // pred_check_branch
      %45 = sbr.rel (0) target = $region13
    $region12: #{tpu_custom_call.1} parent=1 // pred_region
      %46 = dma.done [#allocation3], 256
    $region13: #{tpu_custom_call.1} parent=1 // pred_fallthru
      _
    // Predicated region
    $region14: #{tpu_custom_call.1} parent=1 // pred_check
      _
    $region15: #{tpu_custom_call.1} parent=1 // pred_check_branch
      %48 = sbr.rel (0) target = $region17
    $region16: #{tpu_custom_call.1} parent=1 // pred_region
      %49 = dma.done [#allocation5], 256
    $region17: #{tpu_custom_call.1} parent=1 // pred_fallthru
      _
    %s50 = sadd.s32 0, 0
    %p51 = scmp.lt.s32.totalorder %s50, 0
    %s52 = scalar_select %p51, %s50, 0
    %s53 = smul.u32 8, %s52
    %s54 = sadd.s32 0, 0
    %p55 = scmp.lt.s32.totalorder %s54, 0
    %s56 = scalar_select %p55, %s54, 0
    %s57 = smul.u32 8, %s56
    %p58 = scmp.eq.s32.totalorder 0, 0
    // Predicated region
    $region18: #{tpu_custom_call.1} parent=1 // pred_check
      %p59 = pneg %p58
    $region19: #{tpu_custom_call.1} parent=1 // pred_check_branch
      %61 = sbr.rel (%p59) target = $region21
    $region20: #{tpu_custom_call.1} parent=1 // pred_region
      %vm62 = vcmask 1024
      %63 = vst.msk [vmem:[%s2] sm:$0x3] %vm62, 0.0
      %64 = vst.msk [vmem:[%s3] sm:$0x3] %vm62, 0.0
      %65 = vst.msk [vmem:[%s4] sm:$0x3] %vm62, 0.0
    $region21: #{tpu_custom_call.1} parent=1 // pred_fallthru
      _
    %v66 = vld [vmem:[#allocation2] sm:$0xff]
    %v67 = vld [vmem:[#allocation2 + $0x8] sm:$0xff]
    %v68 = vld [vmem:[#allocation4] sm:$0xff]
    %v69 = vld [vmem:[#allocation4 + $0x8] sm:$0xff]
    %vm70 = vcmp.ne.f32.partialorder %v68, 0.0
    %vm71 = vcmp.ne.f32.partialorder %v69, 0.0
    %v72 = vsub.f32 1.0, %v66
    %v73 = vsub.f32 1.0, %v67
    %v74 = vsel %vm70, %v66, %v72
    %v75 = vsel %vm71, %v67, %v73
    %v76 = vlog2.pop %v74
    %v77 = vmul.f32 %v76, 0.6931472
    %v78 = vlog2.pop %v75
    %v79 = vmul.f32 %v78, 0.6931472
    %v80 = vmax.f32 %v77, -100.0
    %v81 = vmax.f32 %v79, -100.0
    %v82 = vsub.f32 0.0, %v80
    %v83 = vsub.f32 0.0, %v81
    %v84 = vsub.f32 1.0, %v74
    %v85 = vsub.f32 1.0, %v75
    %v86 = vmul.f32 %v84, %v84
    %v87 = vmul.f32 %v85, %v85
    %v88 = vmul.f32 %v82, %v86
    %v89 = vmul.f32 %v83, %v87
    %v90 = vld [vmem:[%s2] sm:$0x3]
    %v93 = vcombine.high %v68, %v68
    %v95 = vunpack.c.l.s4 1983009808
    %v96 = vunpack.c.0.s8 %v95
    %v97 = vlaneseq
    %v98 = vshrl.u32 %v97, 7
    %v99 = vsub.s32 %v96, %v98
    %v100 = vrot.slane %v68, %v99
    %v102 = vunpack.c.l.s4 1983009808
    %v103 = vunpack.c.0.s8 %v102
    %v104 = vlaneseq
    %v105 = vshrl.u32 %v104, 7
    %v106 = vsub.s32 %v103, %v105
    %v107 = vrot.slane %v93, %v106
    %v108 = vcombine.high %v100, %v100
    %v109 = vcombine.high %v107, %v107
    %v110 = vcombine.high %v69, %v69
    %v112 = vunpack.c.l.s4 1983009808
    %v113 = vunpack.c.0.s8 %v112
    %v114 = vlaneseq
    %v115 = vshrl.u32 %v114, 7
    %v116 = vsub.s32 %v113, %v115
    %v117 = vrot.slane %v69, %v116
    %v119 = vunpack.c.l.s4 1983009808
    %v120 = vunpack.c.0.s8 %v119
    %v121 = vlaneseq
    %v122 = vshrl.u32 %v121, 7
    %v123 = vsub.s32 %v120, %v122
    %v124 = vrot.slane %v110, %v123
    %v125 = vcombine.high %v117, %v117
    %v126 = vcombine.high %v124, %v124
    %vm135 = vcmask 1041408
    %v136 = vsel %vm135, %v100, 0.0
    %v137 = vsel %vm135, %v108, 0.0
    %v138 = vadd.f32 %v136, %v137
    %v139 = vsel %vm135, %v107, 0.0
    %v140 = vadd.f32 %v138, %v139
    %v141 = vsel %vm135, %v109, 0.0
    %v142 = vadd.f32 %v140, %v141
    %v143 = vsel %vm135, %v117, 0.0
    %v144 = vadd.f32 %v142, %v143
    %v145 = vsel %vm135, %v125, 0.0
    %v146 = vadd.f32 %v144, %v145
    %v147 = vsel %vm135, %v124, 0.0
    %v148 = vadd.f32 %v146, %v147
    %v149 = vsel %vm135, %v126, 0.0
    %v150 = vadd.f32 %v148, %v149
    %151 = vadd.xlane.f32.xlu0 %v150
    %v152 = vpop.xlane.xlu0 %151
    %v153 = vadd.f32 %v90, %v152
    %vm154 = vcmask 1024
    %155 = vst.msk [vmem:[%s2] sm:$0x3] %vm154, %v153
    %v156 = vld [vmem:[%s3] sm:$0x3]
    %v159 = vcombine.high %v88, %v88
    %v161 = vunpack.c.l.s4 1983009808
    %v162 = vunpack.c.0.s8 %v161
    %v163 = vlaneseq
    %v164 = vshrl.u32 %v163, 7
    %v165 = vsub.s32 %v162, %v164
    %v166 = vrot.slane %v88, %v165
    %v168 = vunpack.c.l.s4 1983009808
    %v169 = vunpack.c.0.s8 %v168
    %v170 = vlaneseq
    %v171 = vshrl.u32 %v170, 7
    %v172 = vsub.s32 %v169, %v171
    %v173 = vrot.slane %v159, %v172
    %v174 = vcombine.high %v166, %v166
    %v175 = vcombine.high %v173, %v173
    %v176 = vcombine.high %v89, %v89
    %v178 = vunpack.c.l.s4 1983009808
    %v179 = vunpack.c.0.s8 %v178
    %v180 = vlaneseq
    %v181 = vshrl.u32 %v180, 7
    %v182 = vsub.s32 %v179, %v181
    %v183 = vrot.slane %v89, %v182
    %v185 = vunpack.c.l.s4 1983009808
    %v186 = vunpack.c.0.s8 %v185
    %v187 = vlaneseq
    %v188 = vshrl.u32 %v187, 7
    %v189 = vsub.s32 %v186, %v188
    %v190 = vrot.slane %v176, %v189
    %v191 = vcombine.high %v183, %v183
    %v192 = vcombine.high %v190, %v190
    %v201 = vsel %vm135, %v166, 0.0
    %v202 = vsel %vm135, %v174, 0.0
    %v203 = vadd.f32 %v201, %v202
    %v204 = vsel %vm135, %v173, 0.0
    %v205 = vadd.f32 %v203, %v204
    %v206 = vsel %vm135, %v175, 0.0
    %v207 = vadd.f32 %v205, %v206
    %v208 = vsel %vm135, %v183, 0.0
    %v209 = vadd.f32 %v207, %v208
    %v210 = vsel %vm135, %v191, 0.0
    %v211 = vadd.f32 %v209, %v210
    %v212 = vsel %vm135, %v190, 0.0
    %v213 = vadd.f32 %v211, %v212
    %v214 = vsel %vm135, %v192, 0.0
    %v215 = vadd.f32 %v213, %v214
    %216 = vadd.xlane.f32.xlu0 %v215
    %v217 = vpop.xlane.xlu0 %216
    %v218 = vadd.f32 %v156, %v217
    %219 = vst.msk [vmem:[%s3] sm:$0x3] %vm154, %v218
    %v220 = vld [vmem:[%s4] sm:$0x3]
    %v221 = vmul.f32 %v88, %v68
    %v222 = vmul.f32 %v89, %v69
    %v225 = vcombine.high %v221, %v221
    %v227 = vunpack.c.l.s4 1983009808
    %v228 = vunpack.c.0.s8 %v227
    %v229 = vlaneseq
    %v230 = vshrl.u32 %v229, 7
    %v231 = vsub.s32 %v228, %v230
    %v232 = vrot.slane %v221, %v231
    %v234 = vunpack.c.l.s4 1983009808
    %v235 = vunpack.c.0.s8 %v234
    %v236 = vlaneseq
    %v237 = vshrl.u32 %v236, 7
    %v238 = vsub.s32 %v235, %v237
    %v239 = vrot.slane %v225, %v238
    %v240 = vcombine.high %v232, %v232
    %v241 = vcombine.high %v239, %v239
    %v242 = vcombine.high %v222, %v222
    %v244 = vunpack.c.l.s4 1983009808
    %v245 = vunpack.c.0.s8 %v244
    %v246 = vlaneseq
    %v247 = vshrl.u32 %v246, 7
    %v248 = vsub.s32 %v245, %v247
    %v249 = vrot.slane %v222, %v248
    %v251 = vunpack.c.l.s4 1983009808
    %v252 = vunpack.c.0.s8 %v251
    %v253 = vlaneseq
    %v254 = vshrl.u32 %v253, 7
    %v255 = vsub.s32 %v252, %v254
    %v256 = vrot.slane %v242, %v255
    %v257 = vcombine.high %v249, %v249
    %v258 = vcombine.high %v256, %v256
    %v267 = vsel %vm135, %v232, 0.0
    %v268 = vsel %vm135, %v240, 0.0
    %v269 = vadd.f32 %v267, %v268
    %v270 = vsel %vm135, %v239, 0.0
    %v271 = vadd.f32 %v269, %v270
    %v272 = vsel %vm135, %v241, 0.0
    %v273 = vadd.f32 %v271, %v272
    %v274 = vsel %vm135, %v249, 0.0
    %v275 = vadd.f32 %v273, %v274
    %v276 = vsel %vm135, %v257, 0.0
    %v277 = vadd.f32 %v275, %v276
    %v278 = vsel %vm135, %v256, 0.0
    %v279 = vadd.f32 %v277, %v278
    %v280 = vsel %vm135, %v258, 0.0
    %v281 = vadd.f32 %v279, %v280
    %282 = vadd.xlane.f32.xlu0 %v281
    %v283 = vpop.xlane.xlu0 %282
    %v284 = vadd.f32 %v220, %v283
    %285 = vst.msk [vmem:[%s4] sm:$0x3] %vm154, %v284
    // Predicated region
    $region22: #{tpu_custom_call.1} parent=1 // pred_check
      _
    $region23: #{tpu_custom_call.1} parent=1 // pred_check_branch
      %287 = sbr.rel (0) target = $region25
    $region24: #{tpu_custom_call.1} parent=1 // pred_region
      _
    $region25: #{tpu_custom_call.1} parent=1 // pred_fallthru
      _
    // Predicated region
    $region26: #{tpu_custom_call.1} parent=1 // pred_check
      _
    $region27: #{tpu_custom_call.1} parent=1 // pred_check_branch
      %289 = sbr.rel (0) target = $region29
    $region28: #{tpu_custom_call.1} parent=1 // pred_region
      _
    $region29: #{tpu_custom_call.1} parent=1 // pred_fallthru
      _
    // Predicated region
    $region30: #{tpu_custom_call.1} parent=1 // pred_check
      _
    $region31: #{tpu_custom_call.1} parent=1 // pred_check_branch
      %291 = sbr.rel (0) target = $region33
    $region32: #{tpu_custom_call.1} parent=1 // pred_region
      _
    $region33: #{tpu_custom_call.1} parent=1 // pred_fallthru
      _
    // Predicated region
    $region34: #{tpu_custom_call.1} parent=1 // pred_check
      _
    $region35: #{tpu_custom_call.1} parent=1 // pred_check_branch
      %293 = sbr.rel (0) target = $region37
    $region36: #{tpu_custom_call.1} parent=1 // pred_region
      _
    $region37: #{tpu_custom_call.1} parent=1 // pred_fallthru
      _
    // Predicated region
    $region38: #{tpu_custom_call.1} parent=1 // pred_check
      _
    $region39: #{tpu_custom_call.1} parent=1 // pred_check_branch
      %295 = sbr.rel (0) target = $region41
    $region40: #{tpu_custom_call.1} parent=1 // pred_region
      _
    $region41: #{tpu_custom_call.1} parent=1 // pred_fallthru
      _
    // Predicated region
    $region42: #{tpu_custom_call.1} parent=1 // pred_check
      _
    $region43: #{tpu_custom_call.1} parent=1 // pred_check_branch
      %297 = sbr.rel (0) target = $region45
    $region44: #{tpu_custom_call.1} parent=1 // pred_region
      _
    $region45: #{tpu_custom_call.1} parent=1 // pred_fallthru
      _
    %298 = vsyncpa [#allocation3], 1
    %299 = vsyncpa [#allocation5], 1

</llo_original>
